<compile_context>
chip_gen: v7x
topology: tpu7x:2x2x1
jax: 0.10.0
libtpu: 0.0.40
codegen_flags: <defaults>
</compile_context>

<pallas_src>
import functools

import jax
import jax.numpy as jnp
from jax.experimental import pallas as pl
from jax.experimental.pallas import tpu as pltpu


def _round_up(x, m):
    return ((x + m - 1) // m) * m


def atomic_embedding_kernel(z_ref, w_ref, o_ref, *, row_chunk):
    # z_ref: (tile_rows, g)           int32 -- atomic numbers, pre-offset by
    #                                          slot*max_z so slot a's values
    #                                          live in [a*max_z, (a+1)*max_z)
    # w_ref: (g*max_z, g*dim_atoms)   f32   -- block-diag folded (W^T + b) table
    # o_ref: (tile_rows, g*dim_atoms) f32   -- packed row-major output tile
    tile_rows, g = z_ref.shape
    k_big = w_ref.shape[0]
    num_chunks = tile_rows // row_chunk

    # Hoisted: table loaded once per grid step; the iota is loop-invariant
    # (JAX does not CSE broadcast_in_dim, so building it inside an unrolled
    # body would re-materialize it once per chunk).
    w = w_ref[...]
    col_ids = jax.lax.broadcasted_iota(jnp.int32, (row_chunk, k_big), 1)

    def body(c, carry):
        start = pl.multiple_of(c * row_chunk, row_chunk)
        z_c = z_ref[pl.ds(start, row_chunk), :]                 # (row_chunk, g)
        # Packed one-hot: slot offsets were pre-added to z and the g slots map
        # to disjoint column ranges, so summing per-slot compares yields the
        # (row_chunk, g*max_z) one-hot directly.
        oh = (col_ids == z_c[:, 0:1]).astype(jnp.float32)
        for a in range(1, g):
            oh = oh + (col_ids == z_c[:, a:a + 1]).astype(jnp.float32)
        # MXU: (row_chunk, g*max_z) @ (g*max_z, g*dim_atoms)
        o_ref[pl.ds(start, row_chunk), :] = jnp.dot(
            oh, w, preferred_element_type=jnp.float32)
        return carry

    # Unroll short loops (LLO scheduling); long loops stay rolled to bound
    # code size — the per-chunk body is already vreg-budgeted.
    jax.lax.fori_loop(0, num_chunks, body, 0, unroll=num_chunks <= 8)


def atomic_embedding(z, w, b, *, tile_n=None, core_parallel=False):
    """AtomicEmbedding forward.

    z: (N,) integer atomic numbers, assumed in [0, max_z)
    w: (dim_atoms, max_z) float32  -- torch.nn.Linear weight
    b: (dim_atoms,)       float32  -- torch.nn.Linear bias
    returns: (N, dim_atoms) float32
    """
    n = z.shape[0]
    dim_atoms, max_z = w.shape

    # Atoms packed per 128-lane output row (full-width vst when dim_atoms | 128).
    g = 128 // dim_atoms if (dim_atoms <= 128 and 128 % dim_atoms == 0) else 1

    # Fold the bias into the table (every one-hot row sums to exactly 1) and
    # build the g-slot block-diagonal table:
    #   w_big[a*max_z + k, a*dim_atoms + d] = W[d, k] + b[d]
    # NOTE: torch.nn.functional.one_hot errors on out-of-range z; here z is
    # assumed in [0, max_z) (an OOB z would select a wrong/zero table row).
    wt = (w + b[:, None]).astype(jnp.float32).T                 # (max_z, dim_atoms)
    if g == 1:
        w_big = wt
    else:
        w_big = jnp.einsum("ab,kd->akbd", jnp.eye(g, dtype=jnp.float32), wt)
        w_big = w_big.reshape(g * max_z, g * dim_atoms)

    # ---- In-kernel row chunk: keep one-hot + iota + MXU result <= ~40 vregs --
    live_per_row = 2 * g * max_z + g * dim_atoms   # 32-bit elements in flight/row
    row_chunk = 8
    for cand in (1024, 512, 256, 128, 64, 32, 16, 8):
        if cand * live_per_row <= 40 * 1024:
            row_chunk = cand
            break

    # ---- Tile selection ------------------------------------------------------
    n_rows = (n + g - 1) // g
    if tile_n is None:
        # Cap atoms/step at 16384 (amortizes the ~0.35us per-grid-step overhead)
        # and by a VMEM budget: double-buffered f32 out tile <= ~6 MiB, safe
        # under default scoped VMEM on all of v5e/v6e/v7x without raising
        # vmem_limit_bytes.
        cap_rows = max(
            row_chunk,
            min(16384 // g, (6 << 20) // (2 * 4 * g * dim_atoms))
            // row_chunk * row_chunk)
        tile_rows = min(cap_rows, _round_up(n_rows, row_chunk))
    else:
        assert tile_n % (8 * g) == 0, f"tile_n must be a multiple of {8 * g}"
        tile_rows = tile_n // g
    row_chunk = min(row_chunk, tile_rows)
    while tile_rows % row_chunk:
        row_chunk //= 2                           # tile_rows is a multiple of 8

    n_rows_pad = _round_up(n_rows, tile_rows)
    n_pad = n_rows_pad * g

    # Pack z: (n_rows_pad, g) with per-slot offsets pre-added (padding uses z=0,
    # a valid index; padded rows are sliced away below).
    z_p = jnp.pad(z.astype(jnp.int32), (0, n_pad - n)).reshape(n_rows_pad, g)
    z_p = z_p + (jnp.arange(g, dtype=jnp.int32) * max_z)[None, :]

    grid = (n_rows_pad // tile_rows,)
    cost = pl.CostEstimate(
        flops=2 * n_rows_pad * (g * max_z) * (g * dim_atoms),
        transcendentals=0,
        bytes_accessed=4 * (n_rows_pad * g * dim_atoms      # output
                            + n_rows_pad * g                 # z
                            + g * max_z * g * dim_atoms),    # table
    )
    # On v7x pass core_parallel=True (and >= 2 grid steps) to use both
    # TensorCores; "parallel" is the portable default for v5e/v6e.
    dims = (pltpu.CORE_PARALLEL,) if core_parallel else ("parallel",)

    out_packed = pl.pallas_call(
        functools.partial(atomic_embedding_kernel, row_chunk=row_chunk),
        out_shape=jax.ShapeDtypeStruct((n_rows_pad, g * dim_atoms), jnp.float32),
        grid_spec=pltpu.PrefetchScalarGridSpec(
            num_scalar_prefetch=0,
            grid=grid,
            in_specs=[
                pl.BlockSpec((tile_rows, g), lambda i: (i, 0)),              # z
                pl.BlockSpec((g * max_z, g * dim_atoms), lambda i: (0, 0)),  # table
            ],
            out_specs=pl.BlockSpec((tile_rows, g * dim_atoms), lambda i: (i, 0)),
        ),
        compiler_params=pltpu.CompilerParams(dimension_semantics=dims),
        cost_estimate=cost,
    )(z_p, w_big)

    # Zero-copy row-major reshape back to (N, dim_atoms); the prefix slice only
    # costs anything when N needed padding.
    return out_packed.reshape(n_pad, dim_atoms)[:n]


if __name__ == "__main__":
    # AtomicEmbedding(max_z=16, dim_atoms=32) on a small batch of atoms.
    max_z = 16
    dim_atoms = 32
    n_atoms = 300   # not a multiple of the packed tile -> exercises padding

    key = jax.random.PRNGKey(0)
    kz, kw, kb = jax.random.split(key, 3)

    # torch.nn.Linear(max_z, dim_atoms): weight (dim_atoms, max_z), bias (dim_atoms,)
    w = jax.random.normal(kw, (dim_atoms, max_z), dtype=jnp.float32) * 0.1
    b = jax.random.normal(kb, (dim_atoms,), dtype=jnp.float32) * 0.1
    z = jax.random.randint(kz, (n_atoms,), 0, max_z, dtype=jnp.int32)

    # Reference: one_hot(z) @ W^T + b
    ref = jax.nn.one_hot(z, max_z, dtype=jnp.float32) @ w.T + b[None, :]

    # Small explicit tile (128 atoms/step) -> 3-step grid, exercises padding.
    out_small = jax.block_until_ready(atomic_embedding(z, w, b, tile_n=128))
    # Default auto-tiling path.
    out_auto = jax.block_until_ready(atomic_embedding(z, w, b))

    for out in (out_small, out_auto):
        assert out.shape == (n_atoms, dim_atoms)
        assert jnp.allclose(out, ref, atol=1e-5, rtol=1e-5)

    print("KERNEL_OK")
</pallas_src>

<mosaic_0001>
module attributes {stable_mosaic.version = 11 : i64} {
  func.func @atomic_embedding_kernel(%arg0: i32, %arg1: memref<32x4xi32, #tpu.memory_space<vmem>>, %arg2: memref<64x128xf32, #tpu.memory_space<vmem>>, %arg3: memref<32x128xf32, #tpu.memory_space<vmem>>) attributes {dimension_semantics = [#tpu.dimension_semantics<parallel>], iteration_bounds = array<i64: 3>, scalar_prefetch = 0 : i64, scratch_operands = 0 : i64, tpu.core_type = #tpu.core_type<tc>, window_params = [{transform_indices = @transform_0, window_bounds = array<i64: 32, 4>}, {pipeline_mode = #tpu.pipeline_mode<synchronous>, transform_indices = @transform_1, window_bounds = array<i64: 64, 128>}, {transform_indices = @transform_2, window_bounds = array<i64: 32, 128>}]} {
    %c0 = arith.constant 0 : index
    %c0_0 = arith.constant 0 : index
    %0 = vector.load %arg2[%c0, %c0_0] : memref<64x128xf32, #tpu.memory_space<vmem>>, vector<64x128xf32>
    %1 = tpu.iota {dimensions = array<i32: 1>} : vector<32x64xi32>
    %c0_i32 = arith.constant 0 : i32
    %c32_i32 = arith.constant 32 : i32
    %2 = arith.muli %c0_i32, %c32_i32 : i32
    %3 = tpu.assume_multiple %2, 32 : i32
    %4 = arith.index_cast %3 : i32 to index
    %c0_1 = arith.constant 0 : index
    %5 = vector.load %arg1[%4, %c0_1] : memref<32x4xi32, #tpu.memory_space<vmem>>, vector<32x4xi32>
    %6 = vector.extract_strided_slice %5 {offsets = [0, 0], sizes = [32, 1], strides = [1, 1]} : vector<32x4xi32> to vector<32x1xi32>
    %7 = vector.broadcast %6 : vector<32x1xi32> to vector<32x64xi32>
    %8 = arith.cmpi eq, %1, %7 : vector<32x64xi32>
    %9 = arith.extui %8 : vector<32x64xi1> to vector<32x64xi32>
    %10 = arith.sitofp %9 : vector<32x64xi32> to vector<32x64xf32>
    %11 = vector.extract_strided_slice %5 {offsets = [0, 1], sizes = [32, 1], strides = [1, 1]} : vector<32x4xi32> to vector<32x1xi32>
    %12 = vector.broadcast %11 : vector<32x1xi32> to vector<32x64xi32>
    %13 = arith.cmpi eq, %1, %12 : vector<32x64xi32>
    %14 = arith.extui %13 : vector<32x64xi1> to vector<32x64xi32>
    %15 = arith.sitofp %14 : vector<32x64xi32> to vector<32x64xf32>
    %16 = arith.addf %10, %15 : vector<32x64xf32>
    %17 = vector.extract_strided_slice %5 {offsets = [0, 2], sizes = [32, 1], strides = [1, 1]} : vector<32x4xi32> to vector<32x1xi32>
    %18 = vector.broadcast %17 : vector<32x1xi32> to vector<32x64xi32>
    %19 = arith.cmpi eq, %1, %18 : vector<32x64xi32>
    %20 = arith.extui %19 : vector<32x64xi1> to vector<32x64xi32>
    %21 = arith.sitofp %20 : vector<32x64xi32> to vector<32x64xf32>
    %22 = arith.addf %16, %21 : vector<32x64xf32>
    %23 = vector.extract_strided_slice %5 {offsets = [0, 3], sizes = [32, 1], strides = [1, 1]} : vector<32x4xi32> to vector<32x1xi32>
    %24 = vector.broadcast %23 : vector<32x1xi32> to vector<32x64xi32>
    %25 = arith.cmpi eq, %1, %24 : vector<32x64xi32>
    %26 = arith.extui %25 : vector<32x64xi1> to vector<32x64xi32>
    %27 = arith.sitofp %26 : vector<32x64xi32> to vector<32x64xf32>
    %28 = arith.addf %22, %27 : vector<32x64xf32>
    %cst = arith.constant dense<0.000000e+00> : vector<32x128xf32>
    %29 = tpu.matmul %28, %0, %cst {dimension_numbers = #tpu.dot_dimension_numbers<[1], [0], [0], [1], [0, 0, 1, 1], [], []>} : vector<32x64xf32>, vector<64x128xf32>, vector<32x128xf32> -> vector<32x128xf32>
    %30 = arith.index_cast %3 : i32 to index
    %c0_2 = arith.constant 0 : index
    %31 = vector.load %arg3[%30, %c0_2] : memref<32x128xf32, #tpu.memory_space<vmem>>, vector<32x128xf32>
    tpu.vector_store %arg3[%30, %c0_2], %29 {strides = array<i32>} : memref<32x128xf32, #tpu.memory_space<vmem>>, vector<32x128xf32>,
    %c1_i32 = arith.constant 1 : i32
    return
  }
  func.func @transform_0(%arg0: i32) -> (i32, i32) {
    %c0_i32 = arith.constant 0 : i32
    %c0_i32_0 = arith.constant 0 : i32
    return %arg0, %c0_i32 : i32, i32
  }
  func.func @transform_1(%arg0: i32) -> (i32, i32) {
    %c0_i32 = arith.constant 0 : i32
    %c0_i32_0 = arith.constant 0 : i32
    %c0_i32_1 = arith.constant 0 : i32
    return %c0_i32, %c0_i32_0 : i32, i32
  }
  func.func @transform_2(%arg0: i32) -> (i32, i32) {
    %c0_i32 = arith.constant 0 : i32
    %c0_i32_0 = arith.constant 0 : i32
    return %arg0, %c0_i32 : i32, i32
  }
}

</mosaic_0001>

<llo_original>
// kernel: tpu_custom_call.1
$region0: #{tpu_custom_call.1}
  #allocation0 [shape = 'u32[]', space=smem, size = 0x4, offset = 0x4, fixed_abs, tag = 'smem constant byte address 0x4 - core index']
  #allocation1 [shape = 'u32[144,128]{1,0:T(1,128)}', space=vmem, size = 0x12000, scoped, tag = 'internal scratch']
  %s0 = inlined_call_operand.vmem [shape: s32[96,4], index: 0, kind: input, shape index: {}]
  %s1 = inlined_call_operand.vmem [shape: f32[64,128], index: 1, kind: input, shape index: {}]
  %s2 = inlined_call_operand.hbm [shape: f32[96,128], index: 2, kind: output, shape index: {}]
  %s3 = sld [smem:[#allocation0]]
  $region41: #{tpu_custom_call.1} parent=0
    _
  %s5 = ssub.s32 1, %s3
  %s6 = scalar_select 0, %s5, %s3
  $region1: #{tpu_custom_call.1} parent=0
    #allocation2 [shape = 'u8[32768]{0}', space=vmem, size = 0x8000, scoped, tag = 'output window, operand 0']
    #allocation3 [shape = 's32[2]{0}', space=sflag, size = 0x8, scoped, tag = 'scoped memory for tpu_custom_call.1']
    %7 = vsyncpa [#allocation3], 0
    %s8 = scalar_lea.sflag [#allocation3], 1
    %9 = vsyncpa %s8, 0
    loop: start=0, step=1, limit=5
    $region2: #{tpu_custom_call.1} parent=1 // loop_pre_header
      _
    $region3: #{tpu_custom_call.1} parent=1 // loop_header
      %s11 = sphi 0, %s15
      %p12 = scmp.ge.s32.totalorder %s11, 5
      %s21 = sphi 0, %s23
      %s24 = sphi 0, %s21
      %s25 = sphi 0, %s24
      %s41 = sphi 0, %s25
      %s45 = sphi 0, %s45
      %s47 = sphi 0, %s45
      %s48 = sphi 0, %s47
      %s62 = sphi 0, %s48
      %s68 = sphi 0, %s70
      %s71 = sphi 0, %s68
      %s72 = sphi 0, %s71
      %s88 = sphi 0, %s72
    $region4: #{tpu_custom_call.1} parent=1 // loop_header_branch
      %14 = sbr.rel (%p12) target = $region8
    $region5: #{tpu_custom_call.1} parent=1 // loop_body
      %s16 = ssub.s32 %s11, 1
      %s17 = ssub.s32 %s11, 2
      %s18 = sadd.s32 %s11, 1
      %s19 = ssub.s32 %s11, %s18
      %p20 = scmp.eq.s32.totalorder %s19, 0
      %s22 = sadd.s32 %s21, 1
      %s23 = scalar_select %p20, %s21, %s22
      %p26 = pneg %p20
      %p27 = scmp.eq.s32.totalorder %s11, 2
      %p28 = por %p26, %p27
      %p29 = scmp.ne.s32.totalorder %s21, %s24
      %p30 = scmp.eq.s32.totalorder %s11, 0
      %p31 = por %p29, %p30
      %p32 = scmp.ne.s32.totalorder %s21, %s24
      %p33 = scmp.eq.s32.totalorder %s16, 2
      %p34 = por %p32, %p33
      %p35 = scmp.ne.s32.totalorder %s24, %s25
      %p36 = scmp.eq.s32.totalorder %s16, 0
      %p37 = por %p35, %p36
      %p38 = scmp.ne.s32.totalorder %s24, %s25
      %p39 = scmp.eq.s32.totalorder %s17, 2
      %p40 = por %p38, %p39
      %p42 = scmp.ne.s32.totalorder %s25, %s41
      %p43 = scmp.eq.s32.totalorder %s17, 0
      %p44 = por %p42, %p43
      %s46 = sadd.s32 %s45, 1
      %p49 = scmp.eq.s32.totalorder %s11, 2
      %p50 = scmp.ne.s32.totalorder %s45, %s47
      %p51 = scmp.eq.s32.totalorder %s11, 0
      %p52 = por %p50, %p51
      %p53 = scmp.ne.s32.totalorder %s45, %s47
      %p54 = scmp.eq.s32.totalorder %s16, 2
      %p55 = por %p53, %p54
      %p56 = scmp.ne.s32.totalorder %s47, %s48
      %p57 = scmp.eq.s32.totalorder %s16, 0
      %p58 = por %p56, %p57
      %p59 = scmp.ne.s32.totalorder %s47, %s48
      %p60 = scmp.eq.s32.totalorder %s17, 2
      %p61 = por %p59, %p60
      %p63 = scmp.ne.s32.totalorder %s48, %s62
      %p64 = scmp.eq.s32.totalorder %s17, 0
      %p65 = por %p63, %p64
      %s66 = ssub.s32 %s11, %s18
      %p67 = scmp.eq.s32.totalorder %s66, 0
      %s69 = sadd.s32 %s68, 1
      %s70 = scalar_select %p67, %s68, %s69
      %p73 = pneg %p67
      %p74 = scmp.eq.s32.totalorder %s11, 2
      %p75 = por %p73, %p74
      %p76 = scmp.ne.s32.totalorder %s68, %s71
      %p77 = scmp.eq.s32.totalorder %s11, 0
      %p78 = por %p76, %p77
      %p79 = scmp.ne.s32.totalorder %s68, %s71
      %p80 = scmp.eq.s32.totalorder %s16, 2
      %p81 = por %p79, %p80
      %p82 = scmp.ne.s32.totalorder %s71, %s72
      %p83 = scmp.eq.s32.totalorder %s16, 0
      %p84 = por %p82, %p83
      %p85 = scmp.ne.s32.totalorder %s71, %s72
      %p86 = scmp.eq.s32.totalorder %s17, 2
      %p87 = por %p85, %p86
      %p89 = scmp.ne.s32.totalorder %s72, %s88
      %p90 = scmp.eq.s32.totalorder %s17, 0
      %p91 = por %p89, %p90
      %p92 = scmp.le.s32.totalorder 1, %s11
      %p93 = scmp.lt.s32.totalorder %s11, 4
      %p94 = pnand %p92, %p93
      %p95 = pneg %p94
      // Predicated region
      $region9: #{tpu_custom_call.1} parent=5 // pred_check
        _
      $region10: #{tpu_custom_call.1} parent=5 // pred_check_branch
        %97 = sbr.rel (%p94) target = $region12
      $region11: #{tpu_custom_call.1} parent=5 // pred_region
        %s98 = ssub.s32 %s11, 1
        // Predicated region
        $region13: #{tpu_custom_call.1} parent=11 // pred_check
          %p99 = pneg %p58
        $region14: #{tpu_custom_call.1} parent=11 // pred_check_branch
          %101 = sbr.rel (%p99) target = $region16
        $region15: #{tpu_custom_call.1} parent=11 // pred_region
          _
        $region16: #{tpu_custom_call.1} parent=11 // pred_fallthru
          _
      $region12: #{tpu_custom_call.1} parent=5 // pred_fallthru
        _
      %p102 = scmp.lt.s32.totalorder %s11, 3
      // Predicated region
      $region17: #{tpu_custom_call.1} parent=5 // pred_check
        %p103 = pneg %p102
      $region18: #{tpu_custom_call.1} parent=5 // pred_check_branch
        %105 = sbr.rel (%p103) target = $region20
      $region19: #{tpu_custom_call.1} parent=5 // pred_region
        // Predicated region
        $region21: #{tpu_custom_call.1} parent=19 // pred_check
          %p106 = pneg %p31
        $region22: #{tpu_custom_call.1} parent=19 // pred_check_branch
          %108 = sbr.rel (%p106) target = $region24
        $region23: #{tpu_custom_call.1} parent=19 // pred_region
          %s109 = smul.u32 4, %s11
          %p110 = scmp.lt.s32.totalorder %s109, 11
          %s111 = scalar_select %p110, %s109, 11
          %s112 = smul.addr %s111, 8
          %s113 = scalar_lea.vmem %s0, %s112
          %s114 = smul.u32 4, %s11
        $region24: #{tpu_custom_call.1} parent=19 // pred_fallthru
          _
      $region20: #{tpu_custom_call.1} parent=5 // pred_fallthru
        _
      %p115 = scmp.le.s32.totalorder 1, %s11
      %p116 = scmp.lt.s32.totalorder %s11, 4
      %p117 = pnand %p115, %p116
      %p118 = pneg %p117
      // Predicated region
      $region25: #{tpu_custom_call.1} parent=5 // pred_check
        _
      $region26: #{tpu_custom_call.1} parent=5 // pred_check_branch
        %120 = sbr.rel (%p117) target = $region28
      $region27: #{tpu_custom_call.1} parent=5 // pred_region
        %s121 = ssub.s32 %s11, 1
        %s122 = smul.u32 4, %s16
        %p123 = scmp.lt.s32.totalorder %s122, 11
        %s124 = scalar_select %p123, %s122, 11
        %s125 = smul.addr %s124, 8
        %s126 = scalar_lea.vmem %s0, %s125
        %p127 = pneg %p37
        %p128 = pneg %p34
        %p129 = pneg %p58
        %p130 = pneg %p55
        %p131 = pneg %p84
        %p132 = pneg %p81
        %s133 = sand.u32 %s71, 1
        %s134 = scalar_lea.sflag [#allocation3], %s133
        %s135 = sand.u32 %s71, 1
        %s136 = smul.addr %s135, 32
        %s137 = scalar_lea.vmem [#allocation2], %s136
        %s138 = smul.u32 4, %s16
        %p139 = scmp.lt.s32.totalorder %s138, 11
        %s140 = scalar_select %p139, %s138, 11
        %s141 = smul.addr %s140, 8
        %s142 = scalar_lea.vmem %s0, %s141
        %s143 = smul.u32 4, %s16
        %s144 = smul.u32 4, %s16
        %v145 = vld [vmem:[%s1] sm:$0xff]
        %v146 = vld [vmem:[%s1 + $0x8] sm:$0xff]
        %v147 = vld [vmem:[%s1 + $0x10] sm:$0xff]
        %v148 = vld [vmem:[%s1 + $0x18] sm:$0xff]
        %v149 = vld [vmem:[%s1 + $0x20] sm:$0xff]
        %v150 = vld [vmem:[%s1 + $0x28] sm:$0xff]
        %v151 = vld [vmem:[%s1 + $0x30] sm:$0xff]
        %v152 = vld [vmem:[%s1 + $0x38] sm:$0xff]
        %v153 = vlaneseq
        %v154 = vand.u32 %v153, 127
        %v155 = vld [vmem:[%s142] sm:$0xff]
        %v156 = vld [vmem:[%s142 + $0x8] sm:$0xff]
        %v157 = vld [vmem:[%s142 + $0x10] sm:$0xff]
        %v158 = vld [vmem:[%s142 + $0x18] sm:$0xff]
        %159 = vset.pattern.permute.xlu0 0
        %160 = vperm.xlu0 %159, %v155
        %v161 = vpop.permute.xlu0 %160
        %162 = vset.pattern.permute.xlu0 0
        %163 = vperm.xlu0 %162, %v156
        %v164 = vpop.permute.xlu0 %163
        %165 = vset.pattern.permute.xlu0 0
        %166 = vperm.xlu0 %165, %v157
        %v167 = vpop.permute.xlu0 %166
        %168 = vset.pattern.permute.xlu0 0
        %169 = vperm.xlu0 %168, %v158
        %v170 = vpop.permute.xlu0 %169
        %vm171 = vcmp.eq.s32.totalorder %v154, %v161
        %vm172 = vcmp.eq.s32.totalorder %v154, %v164
        %vm173 = vcmp.eq.s32.totalorder %v154, %v167
        %vm174 = vcmp.eq.s32.totalorder %v154, %v170
        %v175 = vsel %vm171, 1, 0
        %v176 = vsel %vm172, 1, 0
        %v177 = vsel %vm173, 1, 0
        %v178 = vsel %vm174, 1, 0
        %v179 = vcvt.s32.f32 %v175
        %v180 = vcvt.s32.f32 %v176
        %v181 = vcvt.s32.f32 %v177
        %v182 = vcvt.s32.f32 %v178
        %183 = vset.pattern.permute.xlu0 1
        %184 = vperm.xlu0 %183, %v155
        %v185 = vpop.permute.xlu0 %184
        %186 = vset.pattern.permute.xlu0 1
        %187 = vperm.xlu0 %186, %v156
        %v188 = vpop.permute.xlu0 %187
        %189 = vset.pattern.permute.xlu0 1
        %190 = vperm.xlu0 %189, %v157
        %v191 = vpop.permute.xlu0 %190
        %192 = vset.pattern.permute.xlu0 1
        %193 = vperm.xlu0 %192, %v158
        %v194 = vpop.permute.xlu0 %193
        %vm195 = vcmp.eq.s32.totalorder %v154, %v185
        %vm196 = vcmp.eq.s32.totalorder %v154, %v188
        %vm197 = vcmp.eq.s32.totalorder %v154, %v191
        %vm198 = vcmp.eq.s32.totalorder %v154, %v194
        %v199 = vsel %vm195, 1, 0
        %v200 = vsel %vm196, 1, 0
        %v201 = vsel %vm197, 1, 0
        %v202 = vsel %vm198, 1, 0
        %v203 = vcvt.s32.f32 %v199
        %v204 = vcvt.s32.f32 %v200
        %v205 = vcvt.s32.f32 %v201
        %v206 = vcvt.s32.f32 %v202
        %v207 = vadd.f32 %v179, %v203
        %v208 = vadd.f32 %v180, %v204
        %v209 = vadd.f32 %v181, %v205
        %v210 = vadd.f32 %v182, %v206
        %211 = vset.pattern.permute.xlu0 2
        %212 = vperm.xlu0 %211, %v155
        %v213 = vpop.permute.xlu0 %212
        %214 = vset.pattern.permute.xlu0 2
        %215 = vperm.xlu0 %214, %v156
        %v216 = vpop.permute.xlu0 %215
        %217 = vset.pattern.permute.xlu0 2
        %218 = vperm.xlu0 %217, %v157
        %v219 = vpop.permute.xlu0 %218
        %220 = vset.pattern.permute.xlu0 2
        %221 = vperm.xlu0 %220, %v158
        %v222 = vpop.permute.xlu0 %221
        %vm223 = vcmp.eq.s32.totalorder %v154, %v213
        %vm224 = vcmp.eq.s32.totalorder %v154, %v216
        %vm225 = vcmp.eq.s32.totalorder %v154, %v219
        %vm226 = vcmp.eq.s32.totalorder %v154, %v222
        %v227 = vsel %vm223, 1, 0
        %v228 = vsel %vm224, 1, 0
        %v229 = vsel %vm225, 1, 0
        %v230 = vsel %vm226, 1, 0
        %v231 = vcvt.s32.f32 %v227
        %v232 = vcvt.s32.f32 %v228
        %v233 = vcvt.s32.f32 %v229
        %v234 = vcvt.s32.f32 %v230
        %v235 = vadd.f32 %v207, %v231
        %v236 = vadd.f32 %v208, %v232
        %v237 = vadd.f32 %v209, %v233
        %v238 = vadd.f32 %v210, %v234
        %239 = vset.pattern.permute.xlu0 3
        %240 = vperm.xlu0 %239, %v155
        %v241 = vpop.permute.xlu0 %240
        %242 = vset.pattern.permute.xlu0 3
        %243 = vperm.xlu0 %242, %v156
        %v244 = vpop.permute.xlu0 %243
        %245 = vset.pattern.permute.xlu0 3
        %246 = vperm.xlu0 %245, %v157
        %v247 = vpop.permute.xlu0 %246
        %248 = vset.pattern.permute.xlu0 3
        %249 = vperm.xlu0 %248, %v158
        %v250 = vpop.permute.xlu0 %249
        %vm251 = vcmp.eq.s32.totalorder %v154, %v241
        %vm252 = vcmp.eq.s32.totalorder %v154, %v244
        %vm253 = vcmp.eq.s32.totalorder %v154, %v247
        %vm254 = vcmp.eq.s32.totalorder %v154, %v250
        %v255 = vsel %vm251, 1, 0
        %v256 = vsel %vm252, 1, 0
        %v257 = vsel %vm253, 1, 0
        %v258 = vsel %vm254, 1, 0
        %v259 = vcvt.s32.f32 %v255
        %v260 = vcvt.s32.f32 %v256
        %v261 = vcvt.s32.f32 %v257
        %v262 = vcvt.s32.f32 %v258
        %v263 = vadd.f32 %v235, %v259
        %v264 = vadd.f32 %v236, %v260
        %v265 = vadd.f32 %v237, %v261
        %v266 = vadd.f32 %v238, %v262
        %vm267 = vcmask 523264
        %v269 = vsel %vm267, %v263, 0
        %v272 = vsel %vm267, %v264, 0
        %v275 = vsel %vm267, %v265, 0
        %v278 = vsel %vm267, %v266, 0
        %280 = vmatprep.subr.mxu0 0.0
        %281 = vmatpush1.msra.mxu0 %v145
        %282 = vmatprep.subr.mxu0 0.0
        %283 = vmatpush1.msra.mxu0 %v146
        %284 = vmatprep.subr.mxu0 0.0
        %285 = vmatpush1.msra.mxu0 %v147
        %286 = vmatprep.subr.mxu0 0.0
        %287 = vmatpush1.msra.mxu0 %v148
        %288 = vmatprep.subr.mxu0 0.0
        %289 = vmatpush1.msra.mxu0 %v149
        %290 = vmatprep.subr.mxu0 0.0
        %291 = vmatpush1.msra.mxu0 %v150
        %292 = vmatprep.subr.mxu0 0.0
        %293 = vmatpush1.msra.mxu0 %v151
        %294 = vmatprep.subr.mxu0 0.0
        %295 = vmatpush1.msra.mxu0 %v152
        %296 = vmatprep.subr.mxu0 0.0
        %297 = vmatpush1.msra.mxu0 0.0
        %298 = vmatprep.subr.mxu0 0.0
        %299 = vmatpush1.msra.mxu0 0.0
        %300 = vmatprep.subr.mxu0 0.0
        %301 = vmatpush1.msra.mxu0 0.0
        %302 = vmatprep.subr.mxu0 0.0
        %303 = vmatpush1.msra.mxu0 0.0
        %304 = vmatprep.subr.mxu0 0.0
        %305 = vmatpush1.msra.mxu0 0.0
        %306 = vmatprep.subr.mxu0 0.0
        %307 = vmatpush1.msra.mxu0 0.0
        %308 = vmatprep.subr.mxu0 0.0
        %309 = vmatpush1.msra.mxu0 0.0
        %310 = vmatprep.subr.mxu0 0.0
        %311 = vmatpush1.msra.mxu0 0.0
        %312 = vmatprep.subr.mxu0 0.0
        %313 = vmatpush1.msra.mxu0 0.0
        %314 = vmatprep.subr.mxu0 0.0
        %315 = vmatpush1.msra.mxu0 0.0
        %316 = vmatprep.subr.mxu0 0.0
        %317 = vmatpush1.msra.mxu0 0.0
        %318 = vmatprep.subr.mxu0 0.0
        %319 = vmatpush1.msra.mxu0 0.0
        %320 = vmatprep.subr.mxu0 0.0
        %321 = vmatpush1.msra.mxu0 0.0
        %322 = vmatprep.subr.mxu0 0.0
        %323 = vmatpush1.msra.mxu0 0.0
        %324 = vmatprep.subr.mxu0 0.0
        %325 = vmatpush1.msra.mxu0 0.0
        %326 = vmatprep.subr.mxu0 0.0
        %327 = vmatpush1.msra.mxu0 0.0
        %328 = vmatprep.subr.mxu0 0.0
        %329 = vmatpush1.msra.mxu0 0.0
        %330 = vmatprep.subr.mxu0 0.0
        %331 = vmatpush1.msra.mxu0 0.0
        %332 = vmatprep.subr.mxu0 0.0
        %333 = vmatpush1.msra.mxu0 0.0
        %334 = vmatprep.subr.mxu0 0.0
        %335 = vmatpush1.msra.mxu0 0.0
        %336 = vmatprep.subr.mxu0 0.0
        %337 = vmatpush1.msra.mxu0 0.0
        %338 = vmatprep.subr.mxu0 0.0
        %339 = vmatpush1.msra.mxu0 0.0
        %340 = vmatprep.subr.mxu0 0.0
        %341 = vmatpush1.msra.mxu0 0.0
        %342 = vmatprep.subr.mxu0 0.0
        %343 = vmatpush1.msra.mxu0 0.0
        %344 = vmatprep.mubr.f32.mxu0 0.0
        %345 = vmatmul.mubr.f32.gmra.mrb[0].mxu0 %v269
        %v346 = vpop.f32.mrb[0].mxu0
        %v347 = vadd.f32 0.0, %v346
        %v348 = vpop.f32.mrb[0].mxu0
        %349 = vmatprep.mubr.f32.mxu0 0.0
        %350 = vmatmul.mubr.f32.gmra.mrb[0].mxu0 %v272
        %v351 = vpop.f32.mrb[0].mxu0
        %v352 = vadd.f32 0.0, %v351
        %v353 = vpop.f32.mrb[0].mxu0
        %354 = vmatprep.mubr.f32.mxu0 0.0
        %355 = vmatmul.mubr.f32.gmra.mrb[0].mxu0 %v275
        %v356 = vpop.f32.mrb[0].mxu0
        %v357 = vadd.f32 0.0, %v356
        %v358 = vpop.f32.mrb[0].mxu0
        %359 = vmatprep.mubr.f32.mxu0 0.0
        %360 = vmatmul.mubr.f32.gmra.mrb[0].mxu0 %v278
        %v361 = vpop.f32.mrb[0].mxu0
        %v362 = vadd.f32 0.0, %v361
        %v363 = vpop.f32.mrb[0].mxu0
        %364 = vdwg.mxu0
        %365 = vst [vmem:[%s137] sm:$0xff] %v347
        %366 = vst [vmem:[%s137 + $0x8] sm:$0xff] %v352
        %367 = vst [vmem:[%s137 + $0x10] sm:$0xff] %v357
        %368 = vst [vmem:[%s137 + $0x18] sm:$0xff] %v362
        %s369 = sand.u32 %s71, 1
        %s370 = scalar_lea.sflag [#allocation3], %s369
        %s371 = sand.u32 %s71, 1
        %s372 = smul.addr %s371, 32
        %s373 = scalar_lea.vmem [#allocation2], %s372
        // Predicated region
        $region29: #{tpu_custom_call.1} parent=27 // pred_check
          %p374 = pneg %p81
        $region30: #{tpu_custom_call.1} parent=27 // pred_check_branch
          %376 = sbr.rel (%p374) target = $region32
        $region31: #{tpu_custom_call.1} parent=27 // pred_region
          %s377 = smul.u32 4, %s16
          %s379 = ssub.s32 512, 512
          %380 = vsyncadd %s370, %s379
          %s381 = smul.addr %s377, 128
          %s382 = scalar_lea.hbm %s2, %s381
          %s383 = sshll.u32 %s373, 4
          %s384 = int_to_ptr.vmem [resolvable:$true] %s383
          %389 = dma.vmem_to_hbm [thread:$0]  %s384, 512, %s382, %s370, 128, 128, 8
        $region32: #{tpu_custom_call.1} parent=27 // pred_fallthru
          _
      $region28: #{tpu_custom_call.1} parent=5 // pred_fallthru
        _
      %p390 = scmp.le.s32.totalorder 2, %s11
      // Predicated region
      $region33: #{tpu_custom_call.1} parent=5 // pred_check
        %p391 = pneg %p390
      $region34: #{tpu_custom_call.1} parent=5 // pred_check_branch
        %393 = sbr.rel (%p391) target = $region36
      $region35: #{tpu_custom_call.1} parent=5 // pred_region
        %s394 = ssub.s32 %s11, 2
        // Predicated region
        $region37: #{tpu_custom_call.1} parent=35 // pred_check
          %p395 = pneg %p87
        $region38: #{tpu_custom_call.1} parent=35 // pred_check_branch
          %397 = sbr.rel (%p395) target = $region40
        $region39: #{tpu_custom_call.1} parent=35 // pred_region
          %s398 = sand.u32 %s72, 1
          %s399 = scalar_lea.sflag [#allocation3], %s398
          %s400 = sand.u32 %s72, 1
          %s401 = smul.addr %s400, 32
          %s402 = scalar_lea.vmem [#allocation2], %s401
          %403 = dma.done %s399, 512
        $region40: #{tpu_custom_call.1} parent=35 // pred_fallthru
          _
      $region36: #{tpu_custom_call.1} parent=5 // pred_fallthru
        _
    $region6: #{tpu_custom_call.1} parent=1 // loop_footer
      %s15 = sadd.s32 1, %s11
    $region7: #{tpu_custom_call.1} parent=1 // loop_footer_branch
      %10 = sbr.rel target = $region3
    $region8: #{tpu_custom_call.1} parent=1 // loop_exit
      _
    %404 = vsyncpa [#allocation3], 1
    %s405 = scalar_lea.sflag [#allocation3], 1
    %406 = vsyncpa %s405, 1

</llo_original>
